<compile_context>
chip_gen: v5e
topology: v5e:2x2
jax: 0.10.0
libtpu: 0.0.40
codegen_flags: <defaults>
</compile_context>

<pallas_src>
import functools

import jax
import jax.numpy as jnp
from jax.experimental import pallas as pl
from jax.experimental.pallas import tpu as pltpu


def _round_up(x, m):
    return ((x + m - 1) // m) * m


# ----------------------------- shared tile compute -------------------------- #
def _logits_tile(x_ref, w1_ref, b1_ref, w2_ref, b2_ref, ncls_out):
    """Channel-major logits for one lane-dense tile of points.

    x:  (C_pad16, TN)   bf16   (points on lanes, input channels on sublanes)
    w1: (H, C_pad16)    bf16
    b1: (H, 1)          f32
    w2: (Cc_pad16, H)   bf16
    b2: (Cc_pad8, 1)    f32
    returns (ncls_out, TN) f32
    """
    h = jnp.dot(w1_ref[...], x_ref[...], preferred_element_type=jnp.float32)
    h = jnp.maximum(h + b1_ref[...], 0.0)          # f32 elementwise (v5e-safe)
    logits = jnp.dot(w2_ref[...], h.astype(jnp.bfloat16),
                     preferred_element_type=jnp.float32)
    return logits[:ncls_out, :] + b2_ref[...]


def _partial_loss(logits, lab_ref, *, num_classes, ignore_index, actual_n,
                  tile_i):
    """Per-tile cross-entropy partial sum + valid-point count (both (1,1) f32)."""
    c_pad, tn = logits.shape
    cls = jax.lax.broadcasted_iota(jnp.int32, (c_pad, tn), 0)
    # padded class rows must not enter the softmax
    masked = jnp.where(cls < num_classes, logits, jnp.float32(-1e30))
    m = jnp.max(masked, axis=0, keepdims=True)                     # (1, TN)
    lse = jnp.log(jnp.sum(jnp.exp(masked - m), axis=0, keepdims=True)) + m
    lab = lab_ref[...]                                             # (1, TN) i32
    onehot = cls == lab
    true_logit = jnp.sum(jnp.where(onehot, logits, 0.0), axis=0, keepdims=True)
    # ignore_index + tail padding handled by the same mask
    col = jax.lax.broadcasted_iota(jnp.int32, (1, tn), 1) + tile_i * tn
    valid = (lab != ignore_index) & (col < actual_n)
    ploss = jnp.where(valid, lse - true_logit, 0.0)                # (1, TN)
    loss_sum = jnp.sum(ploss, axis=1, keepdims=True)               # (1, 1)
    cnt = jnp.sum(jnp.where(valid, 1.0, 0.0), axis=1, keepdims=True)
    return loss_sum, cnt


def _write_partial(part_ref, loss_sum, cnt):
    # lane 0 = partial loss sum, lane 1 = partial valid count, rest 0
    lane = jax.lax.broadcasted_iota(jnp.int32, (1, 128), 1)
    part_ref[...] = jnp.where(lane == 0, loss_sum,
                              jnp.where(lane == 1, cnt, 0.0))


# --------------------------------- kernels ----------------------------------- #
def _backbone_kernel(x_ref, w1_ref, b1_ref, w2_ref, b2_ref, logits_ref):
    logits_ref[...] = _logits_tile(
        x_ref, w1_ref, b1_ref, w2_ref, b2_ref,
        logits_ref.shape[0]).astype(logits_ref.dtype)


def _fused_kernel(x_ref, lab_ref, w1_ref, b1_ref, w2_ref, b2_ref,
                  logits_ref, part_ref, *, actual_n, num_classes, ignore_index):
    """Backbone + cross-entropy while the logits tile is still in VMEM."""
    i = pl.program_id(0)
    logits = _logits_tile(x_ref, w1_ref, b1_ref, w2_ref, b2_ref,
                          logits_ref.shape[0])
    logits_ref[...] = logits.astype(logits_ref.dtype)
    s, c = _partial_loss(logits, lab_ref, num_classes=num_classes,
                         ignore_index=ignore_index, actual_n=actual_n, tile_i=i)
    _write_partial(part_ref, s, c)


def _loss_only_kernel(x_ref, lab_ref, w1_ref, b1_ref, w2_ref, b2_ref,
                      part_ref, *, actual_n, num_classes, ignore_index,
                      ncls_out):
    """Training path: logits stay in VMEM, only the tiny per-tile partials hit HBM."""
    i = pl.program_id(0)
    logits = _logits_tile(x_ref, w1_ref, b1_ref, w2_ref, b2_ref, ncls_out)
    s, c = _partial_loss(logits, lab_ref, num_classes=num_classes,
                         ignore_index=ignore_index, actual_n=actual_n, tile_i=i)
    _write_partial(part_ref, s, c)


# ------------------------------- pallas wrappers ----------------------------- #
def _specs(c_pad, hidden, ncls_w, ncls_out, tile_n):
    # Weight/bias specs have constant index_maps: Pallas skips re-DMA when the
    # block index does not change across steps, so they are effectively
    # resident; their double buffers are tiny (<= a few KiB).
    x_spec = pl.BlockSpec((c_pad, tile_n), lambda i: (0, i))
    lab_spec = pl.BlockSpec((1, tile_n), lambda i: (0, i))
    w1_spec = pl.BlockSpec((hidden, c_pad), lambda i: (0, 0))
    b1_spec = pl.BlockSpec((hidden, 1), lambda i: (0, 0))
    w2_spec = pl.BlockSpec((ncls_w, hidden), lambda i: (0, 0))
    b2_spec = pl.BlockSpec((ncls_out, 1), lambda i: (0, 0))
    logits_spec = pl.BlockSpec((ncls_out, tile_n), lambda i: (0, i))
    part_spec = pl.BlockSpec((1, 128), lambda i: (0, i))
    return x_spec, lab_spec, w1_spec, b1_spec, w2_spec, b2_spec, logits_spec, part_spec


_COMPILER_PARAMS = pltpu.CompilerParams(
    dimension_semantics=("parallel",),     # independent tiles; v7x splits over both TCs
    vmem_limit_bytes=48 * 1024 * 1024,     # > v5e 16MiB default scope, <= v7x 64MiB physical
)


def backbone_forward(x_t, w1_t, b1_t, w2_t, b2_t, *, tile_n, ncls_out):
    c_pad, n_pad = x_t.shape
    hidden = w1_t.shape[0]
    ncls_w = w2_t.shape[0]
    xs, _, w1s, b1s, w2s, b2s, ls, _ = _specs(c_pad, hidden, ncls_w, ncls_out, tile_n)
    return pl.pallas_call(
        _backbone_kernel,
        out_shape=jax.ShapeDtypeStruct((ncls_out, n_pad), jnp.float32),
        grid_spec=pltpu.PrefetchScalarGridSpec(
            num_scalar_prefetch=0,
            grid=(n_pad // tile_n,),
            in_specs=[xs, w1s, b1s, w2s, b2s],
            out_specs=ls,
        ),
        compiler_params=_COMPILER_PARAMS,
    )(x_t, w1_t, b1_t, w2_t, b2_t)


def fused_forward_with_loss(x_t, labels, w1_t, b1_t, w2_t, b2_t, *,
                            tile_n, ncls_out, actual_n, num_classes,
                            ignore_index):
    c_pad, n_pad = x_t.shape
    hidden = w1_t.shape[0]
    ncls_w = w2_t.shape[0]
    n_tiles = n_pad // tile_n
    xs, labs, w1s, b1s, w2s, b2s, ls, ps = _specs(c_pad, hidden, ncls_w, ncls_out, tile_n)
    return pl.pallas_call(
        functools.partial(_fused_kernel, actual_n=actual_n,
                          num_classes=num_classes, ignore_index=ignore_index),
        out_shape=(jax.ShapeDtypeStruct((ncls_out, n_pad), jnp.float32),
                   jax.ShapeDtypeStruct((1, 128 * n_tiles), jnp.float32)),
        grid_spec=pltpu.PrefetchScalarGridSpec(
            num_scalar_prefetch=0,
            grid=(n_tiles,),
            in_specs=[xs, labs, w1s, b1s, w2s, b2s],
            out_specs=[ls, ps],
        ),
        compiler_params=_COMPILER_PARAMS,
    )(x_t, labels, w1_t, b1_t, w2_t, b2_t)


def loss_only_forward(x_t, labels, w1_t, b1_t, w2_t, b2_t, *,
                      tile_n, ncls_out, actual_n, num_classes, ignore_index):
    c_pad, n_pad = x_t.shape
    hidden = w1_t.shape[0]
    ncls_w = w2_t.shape[0]
    n_tiles = n_pad // tile_n
    xs, labs, w1s, b1s, w2s, b2s, _, ps = _specs(c_pad, hidden, ncls_w, ncls_out, tile_n)
    return pl.pallas_call(
        functools.partial(_loss_only_kernel, actual_n=actual_n,
                          num_classes=num_classes, ignore_index=ignore_index,
                          ncls_out=ncls_out),
        out_shape=jax.ShapeDtypeStruct((1, 128 * n_tiles), jnp.float32),
        grid_spec=pltpu.PrefetchScalarGridSpec(
            num_scalar_prefetch=0,
            grid=(n_tiles,),
            in_specs=[xs, labs, w1s, b1s, w2s, b2s],
            out_specs=ps,
        ),
        compiler_params=_COMPILER_PARAMS,
    )(x_t, labels, w1_t, b1_t, w2_t, b2_t)


def _loss_from_partials(partials):
    p = partials.reshape(-1, 128)
    loss_sum = jnp.sum(p[:, 0])
    cnt = jnp.sum(p[:, 1])
    return loss_sum / jnp.maximum(cnt, 1.0)


# ------------------------------ DefaultSegmentor ----------------------------- #
class DefaultSegmentorPallas:
    """Pallas re-implementation of Pointcept DefaultSegmentor forward."""

    def __init__(self, c_in, hidden, num_classes, *, tile_n=32768,
                 ignore_index=-1, channel_major_logits=False):
        assert tile_n % 128 == 0
        self.c_in, self.hidden, self.num_classes = c_in, hidden, num_classes
        self.tile_n = tile_n
        self.ignore_index = ignore_index
        self.channel_major_logits = channel_major_logits
        self.training = False

        k1, k2 = jax.random.split(jax.random.PRNGKey(0))
        # deterministic "checkpoint-free" parameter init (f32 master copies)
        self.w1 = jax.random.normal(k1, (c_in, hidden), jnp.float32) * 0.1
        self.b1 = jnp.zeros((1, hidden), jnp.float32)
        self.w2 = jax.random.normal(k2, (hidden, num_classes), jnp.float32) * 0.1
        self.b2 = jnp.zeros((1, num_classes), jnp.float32)

        # kernel-ready channel-major, zero-padded weights.
        # bf16 sublane dims padded to 16 (native bf16 tiling); f32 logits
        # output / bias padded only to 8 to avoid extra writeback.
        self._c_pad = _round_up(c_in, 16)
        self._ncls_w = _round_up(num_classes, 16)
        self._ncls_out = _round_up(num_classes, 8)
        w1_t = jnp.zeros((hidden, self._c_pad), jnp.float32).at[:, :c_in].set(self.w1.T)
        w2_t = jnp.zeros((self._ncls_w, hidden), jnp.float32).at[:num_classes, :].set(self.w2.T)
        self._w1_t = w1_t.astype(jnp.bfloat16)
        self._w2_t = w2_t.astype(jnp.bfloat16)
        self._b1_t = self.b1.reshape(hidden, 1)
        self._b2_t = jnp.zeros((self._ncls_out, 1), jnp.float32).at[:num_classes, 0].set(
            self.b2.reshape(-1))

    # ------------------------------ tiling policy --------------------------- #
    def _pick_tile(self, n):
        # rough per-point VMEM footprint: double-buffered I/O blocks + f32/bf16
        # temporaries of the fused kernel (worst case, logits output included)
        per_pt = (4 * self._c_pad            # x bf16 x2 buffers
                  + 8                        # labels i32 x2
                  + 8 * self._ncls_out       # f32 logits out x2
                  + 6 * self.hidden          # h f32 + bf16 re-cast
                  + 12 * self._ncls_w)       # logits / mask / exp f32 temps
        budget = 20 * 1024 * 1024
        tile = min(self.tile_n, max(128, (budget // per_pt) // 128 * 128))
        n128 = _round_up(n, 128)
        if n128 <= tile:
            # small N: split into 2 grid steps when possible so both v7x
            # TensorCores get work (grid >= 2), else a single tail tile.
            tile = _round_up((n128 + 1) // 2, 128) if n128 >= 256 else n128
        n_pad = _round_up(n128, tile)
        return tile, n_pad

    def _prep_feat(self, feat):
        n, c_in = feat.shape
        assert c_in == self.c_in
        tile_n, n_pad = self._pick_tile(n)
        # layout plumbing: channel-major bf16, channels padded to 16 sublanes,
        # N padded to a tile multiple (tail masked inside the kernel).
        # TODO(synk): fuse this cast/transpose/pad into the pallas_call via
        # CompilerParams(allow_input_fusion=...) to avoid the extra XLA pass.
        x_t = jnp.pad(feat.astype(jnp.bfloat16).T,
                      ((0, self._c_pad - c_in), (0, n_pad - n)))
        return x_t, n, n_pad, tile_n

    # --------------------------------- forward ------------------------------ #
    def forward(self, input_dict):
        if "condition" in input_dict:
            # same semantics as torch: take first element of the condition list
            input_dict["condition"] = input_dict["condition"][0]
        feat = input_dict["feat"]
        x_t, n, n_pad, tile_n = self._prep_feat(feat)

        has_segment = "segment" in input_dict
        if self.training or has_segment:
            # pad labels with ignore_index so tail points drop out of the loss
            labels = jnp.pad(input_dict["segment"].astype(jnp.int32),
                             (0, n_pad - n),
                             constant_values=self.ignore_index).reshape(1, n_pad)

            if self.training:
                # loss-only kernel: logits never leave VMEM
                partials = loss_only_forward(
                    x_t, labels, self._w1_t, self._b1_t, self._w2_t, self._b2_t,
                    tile_n=tile_n, ncls_out=self._ncls_out, actual_n=n,
                    num_classes=self.num_classes, ignore_index=self.ignore_index)
                return dict(loss=_loss_from_partials(partials))

            logits_t, partials = fused_forward_with_loss(
                x_t, labels, self._w1_t, self._b1_t, self._w2_t, self._b2_t,
                tile_n=tile_n, ncls_out=self._ncls_out, actual_n=n,
                num_classes=self.num_classes, ignore_index=self.ignore_index)
            loss = _loss_from_partials(partials)
            seg_logits = self._export_logits(logits_t, n)
            return dict(loss=loss, seg_logits=seg_logits)

        logits_t = backbone_forward(
            x_t, self._w1_t, self._b1_t, self._w2_t, self._b2_t,
            tile_n=tile_n, ncls_out=self._ncls_out)
        return dict(seg_logits=self._export_logits(logits_t, n))

    def _export_logits(self, logits_t, n):
        sl = logits_t[: self.num_classes, :n]
        if self.channel_major_logits:
            # channel-major export (num_classes, N): skips a full HBM
            # transpose pass; downstream argmax/softmax should use axis 0.
            return sl
        return sl.T   # PyTorch-parity (N, num_classes) layout


# ---------------------------------- main ------------------------------------ #
if __name__ == "__main__":
    # N deliberately NOT a multiple of the tile / 128 to exercise tail masking.
    N, C_IN, HIDDEN, N_CLS = 200, 4, 32, 8
    IGNORE = -1

    key = jax.random.PRNGKey(0)
    kf, kl = jax.random.split(key)
    feat = jax.random.normal(kf, (N, C_IN), jnp.float32)
    segment = jax.random.randint(kl, (N,), 0, N_CLS, jnp.int32)
    segment = segment.at[5::17].set(IGNORE)       # exercise ignore_index

    model = DefaultSegmentorPallas(C_IN, HIDDEN, N_CLS, tile_n=32768,
                                   ignore_index=IGNORE)
    input_dict = {
        "feat": feat,
        "segment": segment,
        "condition": ["ScanNet"],  # exercised like the torch module: takes [0]
    }

    # ---- eval path with labels: fused logits + loss kernel ----
    out = model.forward(dict(input_dict))
    seg_logits = jax.block_until_ready(out["seg_logits"])
    loss = jax.block_until_ready(out["loss"])

    # ---- training path: loss-only kernel (no logits HBM writeback) ----
    model.training = True
    out_train = model.forward(dict(input_dict))
    assert set(out_train.keys()) == {"loss"}
    loss_train = jax.block_until_ready(out_train["loss"])
    model.training = False

    # ---- inference path (no 'segment'): logits-only kernel ----
    out_eval = model.forward({"feat": feat})
    seg_logits_eval = jax.block_until_ready(out_eval["seg_logits"])

    # ---- channel-major export path (no wrapper transpose) ----
    model.channel_major_logits = True
    out_cm = model.forward({"feat": feat})
    seg_logits_cm = jax.block_until_ready(out_cm["seg_logits"])
    model.channel_major_logits = False

    # reference in plain JAX on the same bf16-rounded weights / activations
    f32 = jnp.float32
    bf = lambda a: a.astype(jnp.bfloat16).astype(f32)
    hp = jax.lax.Precision.HIGHEST
    h_ref = jnp.maximum(jnp.dot(bf(feat), bf(model.w1), precision=hp) + model.b1, 0.0)
    logits_ref = jnp.dot(bf(h_ref), bf(model.w2), precision=hp) + model.b2
    lse_ref = jax.scipy.special.logsumexp(logits_ref, axis=-1)
    nll_ref = lse_ref - logits_ref[jnp.arange(N), segment]
    valid = segment != IGNORE
    loss_ref = jnp.sum(jnp.where(valid, nll_ref, 0.0)) / jnp.sum(valid)

    assert seg_logits.shape == (N, N_CLS)
    assert jnp.allclose(seg_logits, logits_ref, atol=2e-3, rtol=2e-3)
    assert jnp.allclose(seg_logits_eval, logits_ref, atol=2e-3, rtol=2e-3)
    assert seg_logits_cm.shape == (N_CLS, N)
    assert jnp.allclose(seg_logits_cm, logits_ref.T, atol=2e-3, rtol=2e-3)
    assert jnp.allclose(loss, loss_ref, atol=2e-3, rtol=2e-3)
    assert jnp.allclose(loss_train, loss_ref, atol=2e-3, rtol=2e-3)

    print("KERNEL_OK")
</pallas_src>

<mosaic_0001>
module attributes {stable_mosaic.version = 11 : i64} {
  func.func @_fused_kernel(%arg0: i32, %arg1: memref<16x128xbf16, #tpu.memory_space<vmem>>, %arg2: memref<1x128xi32, #tpu.memory_space<vmem>>, %arg3: memref<32x16xbf16, #tpu.memory_space<vmem>>, %arg4: memref<32x1xf32, #tpu.memory_space<vmem>>, %arg5: memref<16x32xbf16, #tpu.memory_space<vmem>>, %arg6: memref<8x1xf32, #tpu.memory_space<vmem>>, %arg7: memref<8x128xf32, #tpu.memory_space<vmem>>, %arg8: memref<1x128xf32, #tpu.memory_space<vmem>>) attributes {dimension_semantics = [#tpu.dimension_semantics<parallel>], iteration_bounds = array<i64: 2>, scalar_prefetch = 0 : i64, scratch_operands = 0 : i64, tpu.core_type = #tpu.core_type<tc>, window_params = [{transform_indices = @transform_0, window_bounds = array<i64: 16, 128>}, {transform_indices = @transform_1, window_bounds = array<i64: 1, 128>}, {pipeline_mode = #tpu.pipeline_mode<synchronous>, transform_indices = @transform_2, window_bounds = array<i64: 32, 16>}, {pipeline_mode = #tpu.pipeline_mode<synchronous>, transform_indices = @transform_3, window_bounds = array<i64: 32, 1>}, {pipeline_mode = #tpu.pipeline_mode<synchronous>, transform_indices = @transform_4, window_bounds = array<i64: 16, 32>}, {pipeline_mode = #tpu.pipeline_mode<synchronous>, transform_indices = @transform_5, window_bounds = array<i64: 8, 1>}, {transform_indices = @transform_6, window_bounds = array<i64: 8, 128>}, {transform_indices = @transform_7, window_bounds = array<i64: 1, 128>}]} {
    %c0 = arith.constant 0 : index
    %c0_0 = arith.constant 0 : index
    %0 = vector.load %arg3[%c0, %c0_0] : memref<32x16xbf16, #tpu.memory_space<vmem>>, vector<32x16xbf16>
    %c0_1 = arith.constant 0 : index
    %c0_2 = arith.constant 0 : index
    %1 = vector.load %arg1[%c0_1, %c0_2] : memref<16x128xbf16, #tpu.memory_space<vmem>>, vector<16x128xbf16>
    %cst = arith.constant dense<0.000000e+00> : vector<32x128xf32>
    %2 = tpu.matmul %0, %1, %cst {dimension_numbers = #tpu.dot_dimension_numbers<[1], [0], [0], [1], [0, 0, 1, 1], [], []>} : vector<32x16xbf16>, vector<16x128xbf16>, vector<32x128xf32> -> vector<32x128xf32>
    %c0_3 = arith.constant 0 : index
    %c0_4 = arith.constant 0 : index
    %3 = vector.load %arg4[%c0_3, %c0_4] : memref<32x1xf32, #tpu.memory_space<vmem>>, vector<32x1xf32>
    %4 = vector.broadcast %3 : vector<32x1xf32> to vector<32x128xf32>
    %5 = arith.addf %2, %4 : vector<32x128xf32>
    %cst_5 = arith.constant 0.000000e+00 : f32
    %6 = vector.broadcast %cst_5 : f32 to vector<32x128xf32>
    %7 = arith.maximumf %5, %6 : vector<32x128xf32>
    %c0_6 = arith.constant 0 : index
    %c0_7 = arith.constant 0 : index
    %8 = vector.load %arg5[%c0_6, %c0_7] : memref<16x32xbf16, #tpu.memory_space<vmem>>, vector<16x32xbf16>
    %9 = arith.truncf %7 : vector<32x128xf32> to vector<32x128xbf16>
    %cst_8 = arith.constant dense<0.000000e+00> : vector<16x128xf32>
    %10 = tpu.matmul %8, %9, %cst_8 {dimension_numbers = #tpu.dot_dimension_numbers<[1], [0], [0], [1], [0, 0, 1, 1], [], []>} : vector<16x32xbf16>, vector<32x128xbf16>, vector<16x128xf32> -> vector<16x128xf32>
    %11 = vector.extract_strided_slice %10 {offsets = [0, 0], sizes = [8, 128], strides = [1, 1]} : vector<16x128xf32> to vector<8x128xf32>
    %c0_9 = arith.constant 0 : index
    %c0_10 = arith.constant 0 : index
    %12 = vector.load %arg6[%c0_9, %c0_10] : memref<8x1xf32, #tpu.memory_space<vmem>>, vector<8x1xf32>
    %13 = vector.broadcast %12 : vector<8x1xf32> to vector<8x128xf32>
    %14 = arith.addf %11, %13 : vector<8x128xf32>
    %c0_11 = arith.constant 0 : index
    %c0_12 = arith.constant 0 : index
    %15 = vector.load %arg7[%c0_11, %c0_12] : memref<8x128xf32, #tpu.memory_space<vmem>>, vector<8x128xf32>
    tpu.vector_store %arg7[%c0_11, %c0_12], %14 {strides = array<i32>} : memref<8x128xf32, #tpu.memory_space<vmem>>, vector<8x128xf32>,
    %16 = tpu.iota {dimensions = array<i32: 0>} : vector<8x128xi32>
    %c8_i32 = arith.constant 8 : i32
    %17 = vector.broadcast %c8_i32 : i32 to vector<8x128xi32>
    %18 = arith.cmpi slt, %16, %17 : vector<8x128xi32>
    %cst_13 = arith.constant -1.000000e+30 : f32
    %19 = vector.broadcast %cst_13 : f32 to vector<8x128xf32>
    %20 = arith.select %18, %14, %19 : vector<8x128xi1>, vector<8x128xf32>
    %cst_14 = arith.constant dense<0xFF800000> : vector<128xf32>
    %21 = vector.multi_reduction <maximumf>, %20, %cst_14 [0] : vector<8x128xf32> to vector<128xf32>
    %22 = vector.shape_cast %21 : vector<128xf32> to vector<1x128xf32>
    %23 = vector.broadcast %22 : vector<1x128xf32> to vector<8x128xf32>
    %24 = arith.subf %20, %23 : vector<8x128xf32>
    %25 = math.exp %24 : vector<8x128xf32>
    %cst_15 = arith.constant dense<0.000000e+00> : vector<128xf32>
    %26 = vector.multi_reduction <add>, %25, %cst_15 [0] : vector<8x128xf32> to vector<128xf32>
    %27 = vector.shape_cast %26 : vector<128xf32> to vector<1x128xf32>
    %28 = math.log %27 : vector<1x128xf32>
    %29 = arith.addf %28, %22 : vector<1x128xf32>
    %c0_16 = arith.constant 0 : index
    %c0_17 = arith.constant 0 : index
    %30 = vector.load %arg2[%c0_16, %c0_17] : memref<1x128xi32, #tpu.memory_space<vmem>>, vector<1x128xi32>
    %31 = vector.broadcast %30 : vector<1x128xi32> to vector<8x128xi32>
    %32 = arith.cmpi eq, %16, %31 : vector<8x128xi32>
    %cst_18 = arith.constant 0.000000e+00 : f32
    %33 = vector.broadcast %cst_18 : f32 to vector<8x128xf32>
    %34 = arith.select %32, %14, %33 : vector<8x128xi1>, vector<8x128xf32>
    %cst_19 = arith.constant dense<0.000000e+00> : vector<128xf32>
    %35 = vector.multi_reduction <add>, %34, %cst_19 [0] : vector<8x128xf32> to vector<128xf32>
    %36 = vector.shape_cast %35 : vector<128xf32> to vector<1x128xf32>
    %37 = tpu.iota {dimensions = array<i32: 1>} : vector<1x128xi32>
    %c128_i32 = arith.constant 128 : i32
    %38 = arith.muli %arg0, %c128_i32 : i32
    %39 = vector.broadcast %38 : i32 to vector<1x128xi32>
    %40 = arith.addi %37, %39 : vector<1x128xi32>
    %c-1_i32 = arith.constant -1 : i32
    %41 = vector.broadcast %c-1_i32 : i32 to vector<1x128xi32>
    %42 = arith.cmpi ne, %30, %41 : vector<1x128xi32>
    %c200_i32 = arith.constant 200 : i32
    %43 = vector.broadcast %c200_i32 : i32 to vector<1x128xi32>
    %44 = arith.cmpi slt, %40, %43 : vector<1x128xi32>
    %45 = arith.andi %42, %44 : vector<1x128xi1>
    %46 = arith.subf %29, %36 : vector<1x128xf32>
    %cst_20 = arith.constant 0.000000e+00 : f32
    %47 = vector.broadcast %cst_20 : f32 to vector<1x128xf32>
    %48 = arith.select %45, %46, %47 : vector<1x128xi1>, vector<1x128xf32>
    %cst_21 = arith.constant dense<0.000000e+00> : vector<1xf32>
    %49 = vector.multi_reduction <add>, %48, %cst_21 [1] : vector<1x128xf32> to vector<1xf32>
    %50 = vector.shape_cast %49 : vector<1xf32> to vector<1x1xf32>
    %cst_22 = arith.constant 1.000000e+00 : f32
    %cst_23 = arith.constant 0.000000e+00 : f32
    %51 = vector.broadcast %cst_22 : f32 to vector<1x128xf32>
    %52 = vector.broadcast %cst_23 : f32 to vector<1x128xf32>
    %53 = arith.select %45, %51, %52 : vector<1x128xi1>, vector<1x128xf32>
    %cst_24 = arith.constant dense<0.000000e+00> : vector<1xf32>
    %54 = vector.multi_reduction <add>, %53, %cst_24 [1] : vector<1x128xf32> to vector<1xf32>
    %55 = vector.shape_cast %54 : vector<1xf32> to vector<1x1xf32>
    %56 = tpu.iota {dimensions = array<i32: 1>} : vector<1x128xi32>
    %c0_i32 = arith.constant 0 : i32
    %57 = vector.broadcast %c0_i32 : i32 to vector<1x128xi32>
    %58 = arith.cmpi eq, %56, %57 : vector<1x128xi32>
    %c1_i32 = arith.constant 1 : i32
    %59 = vector.broadcast %c1_i32 : i32 to vector<1x128xi32>
    %60 = arith.cmpi eq, %56, %59 : vector<1x128xi32>
    %cst_25 = arith.constant 0.000000e+00 : f32
    %61 = vector.shape_cast %55 : vector<1x1xf32> to vector<1x1xf32>
    %62 = vector.broadcast %61 : vector<1x1xf32> to vector<1x128xf32>
    %63 = vector.broadcast %cst_25 : f32 to vector<1x128xf32>
    %64 = arith.select %60, %62, %63 : vector<1x128xi1>, vector<1x128xf32>
    %65 = vector.shape_cast %50 : vector<1x1xf32> to vector<1x1xf32>
    %66 = vector.broadcast %65 : vector<1x1xf32> to vector<1x128xf32>
    %67 = arith.select %58, %66, %64 : vector<1x128xi1>, vector<1x128xf32>
    %c0_26 = arith.constant 0 : index
    %c0_27 = arith.constant 0 : index
    %68 = vector.load %arg8[%c0_26, %c0_27] : memref<1x128xf32, #tpu.memory_space<vmem>>, vector<1x128xf32>
    tpu.vector_store %arg8[%c0_26, %c0_27], %67 {strides = array<i32>} : memref<1x128xf32, #tpu.memory_space<vmem>>, vector<1x128xf32>,
    return
  }
  func.func @transform_0(%arg0: i32) -> (i32, i32) {
    %c0_i32 = arith.constant 0 : i32
    %c0_i32_0 = arith.constant 0 : i32
    return %c0_i32, %arg0 : i32, i32
  }
  func.func @transform_1(%arg0: i32) -> (i32, i32) {
    %c0_i32 = arith.constant 0 : i32
    %c0_i32_0 = arith.constant 0 : i32
    return %c0_i32, %arg0 : i32, i32
  }
  func.func @transform_2(%arg0: i32) -> (i32, i32) {
    %c0_i32 = arith.constant 0 : i32
    %c0_i32_0 = arith.constant 0 : i32
    %c0_i32_1 = arith.constant 0 : i32
    return %c0_i32, %c0_i32_0 : i32, i32
  }
  func.func @transform_3(%arg0: i32) -> (i32, i32) {
    %c0_i32 = arith.constant 0 : i32
    %c0_i32_0 = arith.constant 0 : i32
    %c0_i32_1 = arith.constant 0 : i32
    return %c0_i32, %c0_i32_0 : i32, i32
  }
  func.func @transform_4(%arg0: i32) -> (i32, i32) {
    %c0_i32 = arith.constant 0 : i32
    %c0_i32_0 = arith.constant 0 : i32
    %c0_i32_1 = arith.constant 0 : i32
    return %c0_i32, %c0_i32_0 : i32, i32
  }
  func.func @transform_5(%arg0: i32) -> (i32, i32) {
    %c0_i32 = arith.constant 0 : i32
    %c0_i32_0 = arith.constant 0 : i32
    %c0_i32_1 = arith.constant 0 : i32
    return %c0_i32, %c0_i32_0 : i32, i32
  }
  func.func @transform_6(%arg0: i32) -> (i32, i32) {
    %c0_i32 = arith.constant 0 : i32
    %c0_i32_0 = arith.constant 0 : i32
    return %c0_i32, %arg0 : i32, i32
  }
  func.func @transform_7(%arg0: i32) -> (i32, i32) {
    %c0_i32 = arith.constant 0 : i32
    %c0_i32_0 = arith.constant 0 : i32
    return %c0_i32, %arg0 : i32, i32
  }
}

</mosaic_0001>

<llo_original>
// kernel: tpu_custom_call.1
$region0: #{tpu_custom_call.1}
  #allocation0 [shape = 'u32[]', space=smem, size = 0x4, offset = 0x4, fixed_abs, tag = 'smem constant byte address 0x4 - core index']
  #allocation1 [shape = 'u32[72,128]{1,0:T(1,128)}', space=vmem, size = 0x9000, scoped, tag = 'internal scratch']
  %s0 = inlined_call_operand.vmem [shape: bf16[16,256], index: 0, kind: input, shape index: {}]
  %s1 = inlined_call_operand.vmem [shape: s32[1,256], index: 1, kind: input, shape index: {}]
  %s2 = inlined_call_operand.vmem [shape: bf16[32,16], index: 2, kind: input, shape index: {}]
  %s3 = inlined_call_operand.vmem [shape: f32[32,1], index: 3, kind: input, shape index: {}]
  %s4 = inlined_call_operand.vmem [shape: bf16[16,32], index: 4, kind: input, shape index: {}]
  %s5 = inlined_call_operand.vmem [shape: f32[8,1], index: 5, kind: input, shape index: {}]
  %s6 = inlined_call_operand.hbm [shape: f32[8,256], index: 6, kind: output, shape index: {0}]
  %s7 = inlined_call_operand.hbm [shape: f32[1,256], index: 7, kind: output, shape index: {1}]
  %8 = xla_tuple %s6, %s7
  %s9 = sld [smem:[#allocation0]]
  $region106: #{tpu_custom_call.1} parent=0
    _
  %s11 = ssub.s32 1, %s9
  %s12 = scalar_select 0, %s11, %s9
  $region1: #{tpu_custom_call.1} parent=0
    #allocation2 [shape = 'u8[8192]{0}', space=vmem, size = 0x2000, scoped, tag = 'input window, operand 0']
    #allocation3 [shape = 'u8[8192]{0}', space=vmem, size = 0x2000, scoped, tag = 'output window, operand 0']
    #allocation4 [shape = 's32[2]{0}', space=sflag, size = 0x8, scoped, tag = 'scoped memory for tpu_custom_call.1']
    #allocation5 [shape = 'u8[1024]{0}', space=vmem, size = 0x400, scoped, tag = 'output window, operand 1']
    #allocation6 [shape = 's32[2]{0}', space=sflag, size = 0x8, scoped, tag = 'scoped memory for tpu_custom_call.1']
    %13 = vsyncpa [#allocation4], 0
    %s14 = scalar_lea.sflag [#allocation4], 1
    %15 = vsyncpa %s14, 0
    %16 = vsyncpa [#allocation6], 0
    %s17 = scalar_lea.sflag [#allocation6], 1
    %18 = vsyncpa %s17, 0
    loop: start=0, step=1, limit=4
    $region2: #{tpu_custom_call.1} parent=1 // loop_pre_header
      _
    $region3: #{tpu_custom_call.1} parent=1 // loop_header
      %s20 = sphi 0, %s24
      %p21 = scmp.ge.s32.totalorder %s20, 4
      %s30 = sphi 0, %s32
      %s33 = sphi 0, %s30
      %s34 = sphi 0, %s33
      %s50 = sphi 0, %s34
      %s56 = sphi 0, %s58
      %s59 = sphi 0, %s56
      %s60 = sphi 0, %s59
      %s76 = sphi 0, %s60
      %s80 = sphi 0, %s80
      %s82 = sphi 0, %s80
      %s83 = sphi 0, %s82
      %s97 = sphi 0, %s83
      %s101 = sphi 0, %s101
      %s103 = sphi 0, %s101
      %s104 = sphi 0, %s103
      %s118 = sphi 0, %s104
      %s122 = sphi 0, %s122
      %s124 = sphi 0, %s122
      %s125 = sphi 0, %s124
      %s139 = sphi 0, %s125
      %s143 = sphi 0, %s143
      %s145 = sphi 0, %s143
      %s146 = sphi 0, %s145
      %s160 = sphi 0, %s146
      %s166 = sphi 0, %s168
      %s169 = sphi 0, %s166
      %s170 = sphi 0, %s169
      %s186 = sphi 0, %s170
      %s192 = sphi 0, %s194
      %s195 = sphi 0, %s192
      %s196 = sphi 0, %s195
      %s212 = sphi 0, %s196
    $region4: #{tpu_custom_call.1} parent=1 // loop_header_branch
      %23 = sbr.rel (%p21) target = $region8
    $region5: #{tpu_custom_call.1} parent=1 // loop_body
      %s25 = ssub.s32 %s20, 1
      %s26 = ssub.s32 %s20, 2
      %s27 = sadd.s32 %s20, 1
      %s28 = ssub.s32 %s20, %s27
      %p29 = scmp.eq.s32.totalorder %s28, 0
      %s31 = sadd.s32 %s30, 1
      %s32 = scalar_select %p29, %s30, %s31
      %p35 = pneg %p29
      %p36 = scmp.eq.s32.totalorder %s20, 1
      %p37 = por %p35, %p36
      %p38 = scmp.ne.s32.totalorder %s30, %s33
      %p39 = scmp.eq.s32.totalorder %s20, 0
      %p40 = por %p38, %p39
      %p41 = scmp.ne.s32.totalorder %s30, %s33
      %p42 = scmp.eq.s32.totalorder %s25, 1
      %p43 = por %p41, %p42
      %p44 = scmp.ne.s32.totalorder %s33, %s34
      %p45 = scmp.eq.s32.totalorder %s25, 0
      %p46 = por %p44, %p45
      %p47 = scmp.ne.s32.totalorder %s33, %s34
      %p48 = scmp.eq.s32.totalorder %s26, 1
      %p49 = por %p47, %p48
      %p51 = scmp.ne.s32.totalorder %s34, %s50
      %p52 = scmp.eq.s32.totalorder %s26, 0
      %p53 = por %p51, %p52
      %s54 = ssub.s32 %s20, %s27
      %p55 = scmp.eq.s32.totalorder %s54, 0
      %s57 = sadd.s32 %s56, 1
      %s58 = scalar_select %p55, %s56, %s57
      %p61 = pneg %p55
      %p62 = scmp.eq.s32.totalorder %s20, 1
      %p63 = por %p61, %p62
      %p64 = scmp.ne.s32.totalorder %s56, %s59
      %p65 = scmp.eq.s32.totalorder %s20, 0
      %p66 = por %p64, %p65
      %p67 = scmp.ne.s32.totalorder %s56, %s59
      %p68 = scmp.eq.s32.totalorder %s25, 1
      %p69 = por %p67, %p68
      %p70 = scmp.ne.s32.totalorder %s59, %s60
      %p71 = scmp.eq.s32.totalorder %s25, 0
      %p72 = por %p70, %p71
      %p73 = scmp.ne.s32.totalorder %s59, %s60
      %p74 = scmp.eq.s32.totalorder %s26, 1
      %p75 = por %p73, %p74
      %p77 = scmp.ne.s32.totalorder %s60, %s76
      %p78 = scmp.eq.s32.totalorder %s26, 0
      %p79 = por %p77, %p78
      %s81 = sadd.s32 %s80, 1
      %p84 = scmp.eq.s32.totalorder %s20, 1
      %p85 = scmp.ne.s32.totalorder %s80, %s82
      %p86 = scmp.eq.s32.totalorder %s20, 0
      %p87 = por %p85, %p86
      %p88 = scmp.ne.s32.totalorder %s80, %s82
      %p89 = scmp.eq.s32.totalorder %s25, 1
      %p90 = por %p88, %p89
      %p91 = scmp.ne.s32.totalorder %s82, %s83
      %p92 = scmp.eq.s32.totalorder %s25, 0
      %p93 = por %p91, %p92
      %p94 = scmp.ne.s32.totalorder %s82, %s83
      %p95 = scmp.eq.s32.totalorder %s26, 1
      %p96 = por %p94, %p95
      %p98 = scmp.ne.s32.totalorder %s83, %s97
      %p99 = scmp.eq.s32.totalorder %s26, 0
      %p100 = por %p98, %p99
      %s102 = sadd.s32 %s101, 1
      %p105 = scmp.eq.s32.totalorder %s20, 1
      %p106 = scmp.ne.s32.totalorder %s101, %s103
      %p107 = scmp.eq.s32.totalorder %s20, 0
      %p108 = por %p106, %p107
      %p109 = scmp.ne.s32.totalorder %s101, %s103
      %p110 = scmp.eq.s32.totalorder %s25, 1
      %p111 = por %p109, %p110
      %p112 = scmp.ne.s32.totalorder %s103, %s104
      %p113 = scmp.eq.s32.totalorder %s25, 0
      %p114 = por %p112, %p113
      %p115 = scmp.ne.s32.totalorder %s103, %s104
      %p116 = scmp.eq.s32.totalorder %s26, 1
      %p117 = por %p115, %p116
      %p119 = scmp.ne.s32.totalorder %s104, %s118
      %p120 = scmp.eq.s32.totalorder %s26, 0
      %p121 = por %p119, %p120
      %s123 = sadd.s32 %s122, 1
      %p126 = scmp.eq.s32.totalorder %s20, 1
      %p127 = scmp.ne.s32.totalorder %s122, %s124
      %p128 = scmp.eq.s32.totalorder %s20, 0
      %p129 = por %p127, %p128
      %p130 = scmp.ne.s32.totalorder %s122, %s124
      %p131 = scmp.eq.s32.totalorder %s25, 1
      %p132 = por %p130, %p131
      %p133 = scmp.ne.s32.totalorder %s124, %s125
      %p134 = scmp.eq.s32.totalorder %s25, 0
      %p135 = por %p133, %p134
      %p136 = scmp.ne.s32.totalorder %s124, %s125
      %p137 = scmp.eq.s32.totalorder %s26, 1
      %p138 = por %p136, %p137
      %p140 = scmp.ne.s32.totalorder %s125, %s139
      %p141 = scmp.eq.s32.totalorder %s26, 0
      %p142 = por %p140, %p141
      %s144 = sadd.s32 %s143, 1
      %p147 = scmp.eq.s32.totalorder %s20, 1
      %p148 = scmp.ne.s32.totalorder %s143, %s145
      %p149 = scmp.eq.s32.totalorder %s20, 0
      %p150 = por %p148, %p149
      %p151 = scmp.ne.s32.totalorder %s143, %s145
      %p152 = scmp.eq.s32.totalorder %s25, 1
      %p153 = por %p151, %p152
      %p154 = scmp.ne.s32.totalorder %s145, %s146
      %p155 = scmp.eq.s32.totalorder %s25, 0
      %p156 = por %p154, %p155
      %p157 = scmp.ne.s32.totalorder %s145, %s146
      %p158 = scmp.eq.s32.totalorder %s26, 1
      %p159 = por %p157, %p158
      %p161 = scmp.ne.s32.totalorder %s146, %s160
      %p162 = scmp.eq.s32.totalorder %s26, 0
      %p163 = por %p161, %p162
      %s164 = ssub.s32 %s20, %s27
      %p165 = scmp.eq.s32.totalorder %s164, 0
      %s167 = sadd.s32 %s166, 1
      %s168 = scalar_select %p165, %s166, %s167
      %p171 = pneg %p165
      %p172 = scmp.eq.s32.totalorder %s20, 1
      %p173 = por %p171, %p172
      %p174 = scmp.ne.s32.totalorder %s166, %s169
      %p175 = scmp.eq.s32.totalorder %s20, 0
      %p176 = por %p174, %p175
      %p177 = scmp.ne.s32.totalorder %s166, %s169
      %p178 = scmp.eq.s32.totalorder %s25, 1
      %p179 = por %p177, %p178
      %p180 = scmp.ne.s32.totalorder %s169, %s170
      %p181 = scmp.eq.s32.totalorder %s25, 0
      %p182 = por %p180, %p181
      %p183 = scmp.ne.s32.totalorder %s169, %s170
      %p184 = scmp.eq.s32.totalorder %s26, 1
      %p185 = por %p183, %p184
      %p187 = scmp.ne.s32.totalorder %s170, %s186
      %p188 = scmp.eq.s32.totalorder %s26, 0
      %p189 = por %p187, %p188
      %s190 = ssub.s32 %s20, %s27
      %p191 = scmp.eq.s32.totalorder %s190, 0
      %s193 = sadd.s32 %s192, 1
      %s194 = scalar_select %p191, %s192, %s193
      %p197 = pneg %p191
      %p198 = scmp.eq.s32.totalorder %s20, 1
      %p199 = por %p197, %p198
      %p200 = scmp.ne.s32.totalorder %s192, %s195
      %p201 = scmp.eq.s32.totalorder %s20, 0
      %p202 = por %p200, %p201
      %p203 = scmp.ne.s32.totalorder %s192, %s195
      %p204 = scmp.eq.s32.totalorder %s25, 1
      %p205 = por %p203, %p204
      %p206 = scmp.ne.s32.totalorder %s195, %s196
      %p207 = scmp.eq.s32.totalorder %s25, 0
      %p208 = por %p206, %p207
      %p209 = scmp.ne.s32.totalorder %s195, %s196
      %p210 = scmp.eq.s32.totalorder %s26, 1
      %p211 = por %p209, %p210
      %p213 = scmp.ne.s32.totalorder %s196, %s212
      %p214 = scmp.eq.s32.totalorder %s26, 0
      %p215 = por %p213, %p214
      %p216 = scmp.le.s32.totalorder 1, %s20
      %p217 = scmp.lt.s32.totalorder %s20, 3
      %p218 = pnand %p216, %p217
      %p219 = pneg %p218
      // Predicated region
      $region9: #{tpu_custom_call.1} parent=5 // pred_check
        _
      $region10: #{tpu_custom_call.1} parent=5 // pred_check_branch
        %221 = sbr.rel (%p218) target = $region12
      $region11: #{tpu_custom_call.1} parent=5 // pred_region
        %s222 = ssub.s32 %s20, 1
        // Predicated region
        $region13: #{tpu_custom_call.1} parent=11 // pred_check
          %p223 = pneg %p93
        $region14: #{tpu_custom_call.1} parent=11 // pred_check_branch
          %225 = sbr.rel (%p223) target = $region16
        $region15: #{tpu_custom_call.1} parent=11 // pred_region
          _
        $region16: #{tpu_custom_call.1} parent=11 // pred_fallthru
          _
        // Predicated region
        $region17: #{tpu_custom_call.1} parent=11 // pred_check
          %p226 = pneg %p114
        $region18: #{tpu_custom_call.1} parent=11 // pred_check_branch
          %228 = sbr.rel (%p226) target = $region20
        $region19: #{tpu_custom_call.1} parent=11 // pred_region
          _
        $region20: #{tpu_custom_call.1} parent=11 // pred_fallthru
          _
        // Predicated region
        $region21: #{tpu_custom_call.1} parent=11 // pred_check
          %p229 = pneg %p135
        $region22: #{tpu_custom_call.1} parent=11 // pred_check_branch
          %231 = sbr.rel (%p229) target = $region24
        $region23: #{tpu_custom_call.1} parent=11 // pred_region
          _
        $region24: #{tpu_custom_call.1} parent=11 // pred_fallthru
          _
        // Predicated region
        $region25: #{tpu_custom_call.1} parent=11 // pred_check
          %p232 = pneg %p156
        $region26: #{tpu_custom_call.1} parent=11 // pred_check_branch
          %234 = sbr.rel (%p232) target = $region28
        $region27: #{tpu_custom_call.1} parent=11 // pred_region
          _
        $region28: #{tpu_custom_call.1} parent=11 // pred_fallthru
          _
      $region12: #{tpu_custom_call.1} parent=5 // pred_fallthru
        _
      %p235 = scmp.lt.s32.totalorder %s20, 2
      // Predicated region
      $region29: #{tpu_custom_call.1} parent=5 // pred_check
        %p236 = pneg %p235
      $region30: #{tpu_custom_call.1} parent=5 // pred_check_branch
        %238 = sbr.rel (%p236) target = $region32
      $region31: #{tpu_custom_call.1} parent=5 // pred_region
        // Predicated region
        $region33: #{tpu_custom_call.1} parent=31 // pred_check
          %p239 = pneg %p40
        $region34: #{tpu_custom_call.1} parent=31 // pred_check_branch
          %241 = sbr.rel (%p239) target = $region36
        $region35: #{tpu_custom_call.1} parent=31 // pred_region
          %s242 = sand.u32 %s30, 1
          %s243 = sand.u32 %s30, 1
          %s244 = smul.addr %s243, 8
          %s245 = scalar_lea.vmem [#allocation2], %s244
          %s246 = smul.addr %s20, 4
          %s247 = scalar_lea.vmem %s0, %s246
          // Predicated region
          $region37: #{tpu_custom_call.1} parent=35 // pred_check
            _
          $region38: #{tpu_custom_call.1} parent=35 // pred_check_branch
            %249 = sbr.rel (0) target = $region40
          $region39: #{tpu_custom_call.1} parent=35 // pred_region
            // Predicated region
            $region41: #{tpu_custom_call.1} parent=39 // pred_check
              _
            $region42: #{tpu_custom_call.1} parent=39 // pred_check_branch
              %251 = sbr.rel target = $region44
            $region43: #{tpu_custom_call.1} parent=39 // pred_region
              // Predicated region
              $region56: #{tpu_custom_call.1} parent=43 // pred_check
                _
              $region57: #{tpu_custom_call.1} parent=43 // pred_check_branch
                %269 = sbr.rel (0) target = $region59
              $region58: #{tpu_custom_call.1} parent=43 // pred_region
                loop: start=0, step=1, limit=1
                $region60: #{tpu_custom_call.1} parent=58 // loop_pre_header
                  _
                $region61: #{tpu_custom_call.1} parent=58 // loop_header
                  %s271 = sphi 0, %s275
                  %p272 = scmp.ge.s32.totalorder %s271, 1
                  %s276 = sphi %s247, %s247
                  %s277 = sphi %s245, %s245
                $region62: #{tpu_custom_call.1} parent=58 // loop_header_branch
                  %274 = sbr.rel (%p272) target = $region66
                $region63: #{tpu_custom_call.1} parent=58 // loop_body
                  _
                $region64: #{tpu_custom_call.1} parent=58 // loop_footer
                  %s275 = sadd.s32 1, %s271
                $region65: #{tpu_custom_call.1} parent=58 // loop_footer_branch
                  %270 = sbr.rel target = $region61
                $region66: #{tpu_custom_call.1} parent=58 // loop_exit
                  _
                %s279 = ssub.s32 16, 1
                loop: start=0, step=1, limit=1
                $region67: #{tpu_custom_call.1} parent=58 // loop_pre_header
                  _
                $region68: #{tpu_custom_call.1} parent=58 // loop_header
                  %s281 = sphi 0, %s285
                  %p282 = scmp.ge.s32.totalorder %s281, 1
                  %s286 = sphi %s247, %s247
                  %s287 = sphi %s245, %s245
                $region69: #{tpu_custom_call.1} parent=58 // loop_header_branch
                  %284 = sbr.rel (%p282) target = $region73
                $region70: #{tpu_custom_call.1} parent=58 // loop_body
                  %v288 = vld [vmem:[%s286] sm:%s279]
                  %289 = vst [vmem:[%s287] sm:%s279] %v288
                  %v290 = vld [vmem:[%s286 + $0x8] sm:%s279]
                  %291 = vst [vmem:[%s287 + $0x4] sm:%s279] %v290
                $region71: #{tpu_custom_call.1} parent=58 // loop_footer
                  %s285 = sadd.s32 1, %s281
                $region72: #{tpu_custom_call.1} parent=58 // loop_footer_branch
                  %280 = sbr.rel target = $region68
                $region73: #{tpu_custom_call.1} parent=58 // loop_exit
                  _
              $region59: #{tpu_custom_call.1} parent=43 // pred_fallthru
                _
            $region44: #{tpu_custom_call.1} parent=39 // pred_fallthru
              _
            // Predicated region
            $region45: #{tpu_custom_call.1} parent=39 // pred_check
              _
            $region46: #{tpu_custom_call.1} parent=39 // pred_check_branch
              %253 = sbr.rel (0) target = $region48
            $region47: #{tpu_custom_call.1} parent=39 // pred_region
              %s255 = ssub.s32 16, 1
              loop: start=0, step=1, limit=1
              $region49: #{tpu_custom_call.1} parent=47 // loop_pre_header
                _
              $region50: #{tpu_custom_call.1} parent=47 // loop_header
                %s257 = sphi 0, %s261
                %p258 = scmp.ge.s32.totalorder %s257, 1
                %s262 = sphi %s247, %s247
                %s263 = sphi %s245, %s245
              $region51: #{tpu_custom_call.1} parent=47 // loop_header_branch
                %260 = sbr.rel (%p258) target = $region55
              $region52: #{tpu_custom_call.1} parent=47 // loop_body
                %v264 = vld [vmem:[%s262] sm:%s255]
                %265 = vst [vmem:[%s263] sm:%s255] %v264
                %v266 = vld [vmem:[%s262 + $0x8] sm:%s255]
                %267 = vst [vmem:[%s263 + $0x4] sm:%s255] %v266
              $region53: #{tpu_custom_call.1} parent=47 // loop_footer
                %s261 = sadd.s32 1, %s257
              $region54: #{tpu_custom_call.1} parent=47 // loop_footer_branch
                %256 = sbr.rel target = $region50
              $region55: #{tpu_custom_call.1} parent=47 // loop_exit
                _
            $region48: #{tpu_custom_call.1} parent=39 // pred_fallthru
              _
          $region40: #{tpu_custom_call.1} parent=35 // pred_fallthru
            _
          %292 = vnop
        $region36: #{tpu_custom_call.1} parent=31 // pred_fallthru
          _
        // Predicated region
        $region74: #{tpu_custom_call.1} parent=31 // pred_check
          %p293 = pneg %p66
        $region75: #{tpu_custom_call.1} parent=31 // pred_check_branch
          %295 = sbr.rel (%p293) target = $region77
        $region76: #{tpu_custom_call.1} parent=31 // pred_region
          %p296 = scmp.lt.s32.totalorder %s20, 1
          %s297 = scalar_select %p296, %s20, 1
          %s298 = scalar_lea.vmem %s1, %s297
        $region77: #{tpu_custom_call.1} parent=31 // pred_fallthru
          _
      $region32: #{tpu_custom_call.1} parent=5 // pred_fallthru
        _
      %p299 = scmp.le.s32.totalorder 1, %s20
      %p300 = scmp.lt.s32.totalorder %s20, 3
      %p301 = pnand %p299, %p300
      %p302 = pneg %p301
      // Predicated region
      $region78: #{tpu_custom_call.1} parent=5 // pred_check
        _
      $region79: #{tpu_custom_call.1} parent=5 // pred_check_branch
        %304 = sbr.rel (%p301) target = $region81
      $region80: #{tpu_custom_call.1} parent=5 // pred_region
        %s305 = ssub.s32 %s20, 1
        %s306 = sand.u32 %s33, 1
        %s307 = sand.u32 %s33, 1
        %s308 = smul.addr %s307, 8
        %s309 = scalar_lea.vmem [#allocation2], %s308
        // Predicated region
        $region82: #{tpu_custom_call.1} parent=80 // pred_check
          %p310 = pneg %p46
        $region83: #{tpu_custom_call.1} parent=80 // pred_check_branch
          %312 = sbr.rel (%p310) target = $region85
        $region84: #{tpu_custom_call.1} parent=80 // pred_region
          _
        $region85: #{tpu_custom_call.1} parent=80 // pred_fallthru
          _
        %s313 = sand.u32 %s33, 1
        %s314 = sand.u32 %s33, 1
        %s315 = smul.addr %s314, 8
        %s316 = scalar_lea.vmem [#allocation2], %s315
        %p317 = pneg %p46
        %p318 = pneg %p43
        %p319 = scmp.lt.s32.totalorder %s25, 1
        %s320 = scalar_select %p319, %s25, 1
        %s321 = scalar_lea.vmem %s1, %s320
        %p322 = pneg %p72
        %p323 = pneg %p69
        %p324 = pneg %p93
        %p325 = pneg %p90
        %p326 = pneg %p114
        %p327 = pneg %p111
        %p328 = pneg %p135
        %p329 = pneg %p132
        %p330 = pneg %p156
        %p331 = pneg %p153
        %p332 = pneg %p182
        %p333 = pneg %p179
        %s334 = sand.u32 %s169, 1
        %s335 = scalar_lea.sflag [#allocation4], %s334
        %s336 = sand.u32 %s169, 1
        %s337 = smul.addr %s336, 8
        %s338 = scalar_lea.vmem [#allocation3], %s337
        %p339 = pneg %p208
        %p340 = pneg %p205
        %s341 = sand.u32 %s195, 1
        %s342 = scalar_lea.sflag [#allocation6], %s341
        %s343 = sand.u32 %s195, 1
        %s344 = scalar_lea.vmem [#allocation5], %s343
        %p345 = scmp.lt.s32.totalorder %s25, 1
        %s346 = scalar_select %p345, %s25, 1
        %s347 = scalar_lea.vmem %s1, %s346
        %v349 = vld [vmem:[%s2] sm:$0xf]
        %v350 = vld [vmem:[%s2 + $0x4] sm:$0xf]
        %v351 = vld [vmem:[%s2 + $0x8] sm:$0xf]
        %v352 = vld [vmem:[%s2 + $0xc] sm:$0xf]
        %v353 = vld [vmem:[%s309] sm:$0xf]
        %v354 = vld [vmem:[%s309 + $0x4] sm:$0xf]
        %v355 = vld [vmem:[%s3] sm:$0xff]
        %v356 = vld [vmem:[%s3 + $0x8] sm:$0xff]
        %v357 = vld [vmem:[%s3 + $0x10] sm:$0xff]
        %v358 = vld [vmem:[%s3 + $0x18] sm:$0xff]
        %360 = vset.pattern.permute.xlu0 0
        %361 = vperm.xlu0 %360, %v355
        %v362 = vpop.permute.xlu0 %361
        %365 = vset.pattern.permute.xlu0 0
        %366 = vperm.xlu0 %365, %v356
        %v367 = vpop.permute.xlu0 %366
        %370 = vset.pattern.permute.xlu0 0
        %371 = vperm.xlu0 %370, %v357
        %v372 = vpop.permute.xlu0 %371
        %375 = vset.pattern.permute.xlu0 0
        %376 = vperm.xlu0 %375, %v358
        %v377 = vpop.permute.xlu0 %376
        %v383 = vunpack.c.l.b16 %v349
        %v384 = vunpack.c.l.b16 %v350
        %v385 = vunpack.c.l.b16 %v351
        %v386 = vunpack.c.l.b16 %v352
        %v387 = vpack.c.b16 %v384, %v383
        %v388 = vpack.c.b16 %v386, %v385
        %v391 = vunpack.c.l.b16 %v353
        %v392 = vunpack.c.l.b16 %v354
        %v393 = vpack.c.b16 %v392, %v391
        %vm395 = vcmask 130048
        %v397 = vsel %vm395, %v387, 0
        %v400 = vsel %vm395, %v388, 0
        %402 = vmatpush.bf16.msra.mxu0 0
        %403 = vmatpush.bf16.msra.mxu0 0
        %404 = vmatpush.bf16.msra.mxu0 0
        %405 = vmatpush.bf16.msra.mxu0 0
        %406 = vmatpush.bf16.msra.mxu0 0
        %407 = vmatpush.bf16.msra.mxu0 0
        %408 = vmatpush.bf16.msra.mxu0 0
        %409 = vmatpush.bf16.msra.mxu0 %v393
        %410 = vmatmul.bf16.gmra.mxu0 %v397
        %v411 = vpop.f32.mrf.mxu0
        %v412 = vadd.f32 %v362, %v411
        %v413 = vpop.f32.mrf.mxu0
        %v414 = vadd.f32 %v367, %v413
        %415 = vmatmul.bf16.gmra.mxu0 %v400
        %v416 = vpop.f32.mrf.mxu0
        %v417 = vadd.f32 %v372, %v416
        %v418 = vpop.f32.mrf.mxu0
        %v419 = vadd.f32 %v377, %v418
        %420 = vdwg.mxu0
        %v421 = vmax.f32 %v412, 0.0
        %v422 = vmax.f32 %v414, 0.0
        %v423 = vmax.f32 %v417, 0.0
        %v424 = vmax.f32 %v419, 0.0
        %v425 = vld [vmem:[%s4] sm:$0xf]
        %v426 = vld [vmem:[%s4 + $0x4] sm:$0xf]
        %v427 = vpack.c.bf16 %v422, %v421
        %v428 = vpack.c.bf16 %v424, %v423
        %v431 = vunpack.c.l.b16 %v425
        %v432 = vunpack.c.l.b16 %v426
        %v433 = vpack.c.b16 %v432, %v431
        %vm434 = vcmask 261120
        %v436 = vsel %vm434, %v433, 0
        %438 = vmatpush.bf16.msra.mxu0 0
        %439 = vmatpush.bf16.msra.mxu0 0
        %440 = vmatpush.bf16.msra.mxu0 0
        %441 = vmatpush.bf16.msra.mxu0 0
        %442 = vmatpush.bf16.msra.mxu0 0
        %443 = vmatpush.bf16.msra.mxu0 0
        %444 = vmatpush.bf16.msra.mxu0 %v428
        %445 = vmatpush.bf16.msra.mxu0 %v427
        %446 = vmatmul.bf16.gmra.mxu0 %v436
        %v447 = vpop.f32.mrf.mxu0
        %v448 = vadd.f32 0.0, %v447
        %v449 = vpop.f32.mrf.mxu0
        %450 = vdwg.mxu0
        %v451 = vld [vmem:[%s5] sm:$0xff]
        %453 = vset.pattern.permute.xlu0 0
        %454 = vperm.xlu0 %453, %v451
        %v455 = vpop.permute.xlu0 %454
        %v457 = vadd.f32 %v448, %v455
        %458 = vst [vmem:[%s338] sm:$0xff] %v457
        %v459 = vlaneseq
        %v460 = vshrl.u32 %v459, 7
        %vm461 = vcmp.lt.s32.totalorder %v460, 8
        %v462 = vsel %vm461, %v457, -1e+30
        %v463 = vrot.slane %v462, 4
        %v464 = vmax.f32 %v462, %v463
        %v465 = vrot.slane %v464, 2
        %v466 = vmax.f32 %v464, %v465
        %v467 = vrot.slane %v466, 1
        %v468 = vmax.f32 %v466, %v467
        %v469 = vsub.f32 %v462, %v468
        %v470 = vmul.f32 %v469, 1.442695
        %v471 = vpow.pop %v470
        %v472 = vrot.slane %v471, 4
        %v473 = vadd.f32 %v471, %v472
        %v474 = vrot.slane %v473, 2
        %v475 = vadd.f32 %v473, %v474
        %v476 = vrot.slane %v475, 1
        %v477 = vadd.f32 %v475, %v476
        %v478 = vlog2.pop %v477
        %v479 = vmul.f32 %v478, 0.6931472
        %v480 = vadd.f32 %v479, %v468
        %v481 = vld [vmem:[%s347] sm:$0x1]
        %v482 = vperm.slane %v481, 0
        %vm483 = vcmp.eq.s32.totalorder %v460, %v482
        %v484 = vsel %vm483, %v457, 0.0
        %v485 = vrot.slane %v484, 4
        %v486 = vadd.f32 %v484, %v485
        %v487 = vrot.slane %v486, 2
        %v488 = vadd.f32 %v486, %v487
        %v489 = vrot.slane %v488, 1
        %v490 = vadd.f32 %v488, %v489
        %v491 = vlaneseq
        %v492 = vand.u32 %v491, 127
        %s493 = smul.u32 %s25, 128
        %v494 = vstv %s493
        %v495 = vadd.s32 %v492, %v494
        %vm496 = vcmp.ne.s32.totalorder %v481, 4294967295
        %vm497 = vcmp.lt.s32.totalorder %v495, 200
        %vm498 = vmand %vm496, %vm497
        %v499 = vsub.f32 %v480, %v490
        %v500 = vsel %vm498, %v499, 0.0
        %vm501 = vcmask 1040384
        %v502 = vsel %vm501, %v500, 0.0
        %503 = vadd.xlane.f32.xlu0 %v502
        %v504 = vpop.xlane.xlu0 %503
        %v505 = vsel %vm498, 1.0, 0.0
        %v506 = vsel %vm501, %v505, 0.0
        %507 = vadd.xlane.f32.xlu0 %v506
        %v508 = vpop.xlane.xlu0 %507
        %vm509 = vcmp.eq.s32.totalorder %v492, 0
        %vm510 = vcmp.eq.s32.totalorder %v492, 1
        %v511 = vsel %vm510, %v508, 0.0
        %v512 = vsel %vm509, %v504, %v511
        %513 = vst [vmem:[%s344] sm:$0x1] %v512
        %s514 = sand.u32 %s169, 1
        %s515 = scalar_lea.sflag [#allocation4], %s514
        %s516 = sand.u32 %s169, 1
        %s517 = smul.addr %s516, 8
        %s518 = scalar_lea.vmem [#allocation3], %s517
        %s519 = sand.u32 %s195, 1
        %s520 = scalar_lea.sflag [#allocation6], %s519
        %s521 = sand.u32 %s195, 1
        %s522 = scalar_lea.vmem [#allocation5], %s521
        // Predicated region
        $region86: #{tpu_custom_call.1} parent=80 // pred_check
          %p523 = pneg %p179
        $region87: #{tpu_custom_call.1} parent=80 // pred_check_branch
          %525 = sbr.rel (%p523) target = $region89
        $region88: #{tpu_custom_call.1} parent=80 // pred_region
          %527 = vsyncadd %s515, 0
          %s528 = smul.addr %s25, 8
          %s529 = scalar_lea.hbm %s6, %s528
          %s531 = sshll.u32 %s518, 4
          %s532 = int_to_ptr.vmem [resolvable:$true] %s531
          %s533 = sshll.u32 %s529, 4
          %s534 = int_to_ptr.hbm [resolvable:$true] %s533
          %536 = dma.vmem_to_hbm [thread:$0]  %s532, 128, %s534, %s515
        $region89: #{tpu_custom_call.1} parent=80 // pred_fallthru
          _
        // Predicated region
        $region90: #{tpu_custom_call.1} parent=80 // pred_check
          %p537 = pneg %p205
        $region91: #{tpu_custom_call.1} parent=80 // pred_check_branch
          %539 = sbr.rel (%p537) target = $region93
        $region92: #{tpu_custom_call.1} parent=80 // pred_region
          %541 = vsyncadd %s520, 0
          %s542 = scalar_lea.hbm %s7, %s25
          %s544 = sshll.u32 %s522, 4
          %s545 = int_to_ptr.vmem [resolvable:$true] %s544
          %s546 = sshll.u32 %s542, 4
          %s547 = int_to_ptr.hbm [resolvable:$true] %s546
          %549 = dma.vmem_to_hbm [thread:$0]  %s545, 16, %s547, %s520
        $region93: #{tpu_custom_call.1} parent=80 // pred_fallthru
          _
      $region81: #{tpu_custom_call.1} parent=5 // pred_fallthru
        _
      %p550 = scmp.le.s32.totalorder 2, %s20
      // Predicated region
      $region94: #{tpu_custom_call.1} parent=5 // pred_check
        %p551 = pneg %p550
      $region95: #{tpu_custom_call.1} parent=5 // pred_check_branch
        %553 = sbr.rel (%p551) target = $region97
      $region96: #{tpu_custom_call.1} parent=5 // pred_region
        %s554 = ssub.s32 %s20, 2
        // Predicated region
        $region98: #{tpu_custom_call.1} parent=96 // pred_check
          %p555 = pneg %p185
        $region99: #{tpu_custom_call.1} parent=96 // pred_check_branch
          %557 = sbr.rel (%p555) target = $region101
        $region100: #{tpu_custom_call.1} parent=96 // pred_region
          %s558 = sand.u32 %s170, 1
          %s559 = scalar_lea.sflag [#allocation4], %s558
          %s560 = sand.u32 %s170, 1
          %s561 = smul.addr %s560, 8
          %s562 = scalar_lea.vmem [#allocation3], %s561
          %564 = dma.done %s559, 128
        $region101: #{tpu_custom_call.1} parent=96 // pred_fallthru
          _
        // Predicated region
        $region102: #{tpu_custom_call.1} parent=96 // pred_check
          %p565 = pneg %p211
        $region103: #{tpu_custom_call.1} parent=96 // pred_check_branch
          %567 = sbr.rel (%p565) target = $region105
        $region104: #{tpu_custom_call.1} parent=96 // pred_region
          %s568 = sand.u32 %s196, 1
          %s569 = scalar_lea.sflag [#allocation6], %s568
          %s570 = sand.u32 %s196, 1
          %s571 = scalar_lea.vmem [#allocation5], %s570
          %573 = dma.done %s569, 16
        $region105: #{tpu_custom_call.1} parent=96 // pred_fallthru
          _
      $region97: #{tpu_custom_call.1} parent=5 // pred_fallthru
        _
    $region6: #{tpu_custom_call.1} parent=1 // loop_footer
      %s24 = sadd.s32 1, %s20
    $region7: #{tpu_custom_call.1} parent=1 // loop_footer_branch
      %19 = sbr.rel target = $region3
    $region8: #{tpu_custom_call.1} parent=1 // loop_exit
      _
    %574 = vsyncpa [#allocation4], 1
    %s575 = scalar_lea.sflag [#allocation4], 1
    %576 = vsyncpa %s575, 1
    %577 = vsyncpa [#allocation6], 1
    %s578 = scalar_lea.sflag [#allocation6], 1
    %579 = vsyncpa %s578, 1

</llo_original>
